<compile_context>
chip_gen: v5e
topology: v5e:2x2
jax: 0.10.0
libtpu: 0.0.40
codegen_flags: <defaults>
</compile_context>

<pallas_src>
import math

import jax
import jax.numpy as jnp
from jax import lax
from jax.experimental import pallas as pl
from jax.experimental.pallas import tpu as pltpu


def _gelu_exact(x):
    # PyTorch nn.GELU() default: exact erf-based GELU (kept in f32).
    return 0.5 * x * (1.0 + lax.erf(x * (1.0 / math.sqrt(2.0))))


def _layernorm(x, gamma, beta, eps=1e-5):
    mu = jnp.mean(x, axis=-1, keepdims=True)
    var = jnp.mean((x - mu) ** 2, axis=-1, keepdims=True)
    return (x - mu) * lax.rsqrt(var + eps) * gamma + beta


def mixer_kernel(
    x_ref,
    ln1_g_ref, ln1_b_ref, ln2_g_ref, ln2_b_ref,
    w1s_ref, b1s_ref, w2s_ref, b2s_ref,   # token mixing:  (D_s,S)bf16, (D_s,1), (S,D_s)bf16, (S,1)
    w1c_ref, b1c_ref, w2c_ref, b2c_ref,   # channel mixing:(C,D_c)bf16, (1,D_c), (D_c,C)bf16, (1,C)
    o_ref,
):
    Bt, S, C = x_ref.shape
    x = x_ref[...].astype(jnp.float32).reshape(Bt * S, C)        # (Bt*S, C) f32

    # --- LayerNorm 1 (over channels), f32 ---
    n1 = _layernorm(x, ln1_g_ref[...], ln1_b_ref[...])
    n1_bf = n1.astype(jnp.bfloat16)

    # --- Token mixing: W @ act per batch element. Both matmul outputs land
    #     directly in (rows, C) orientation -> no activation/weight transposes.
    w1s = w1s_ref[...]                                            # (D_s, S) bf16
    w2s = w2s_ref[...]                                            # (S, D_s) bf16
    b1s = b1s_ref[...]                                            # (D_s, 1) f32
    b2s = b2s_ref[...]                                            # (S, 1)   f32
    tok = []
    for b in range(Bt):                                           # static unroll (Bt small)
        nb = n1_bf[b * S:(b + 1) * S, :]                          # (S, C)
        h = jnp.dot(w1s, nb, preferred_element_type=jnp.float32) + b1s   # (D_s, C)
        g = _gelu_exact(h).astype(jnp.bfloat16)
        tok.append(jnp.dot(w2s, g, preferred_element_type=jnp.float32) + b2s)  # (S, C)
    x = x + (tok[0] if Bt == 1 else jnp.concatenate(tok, axis=0))

    # --- LayerNorm 2 + channel mixing on the full (Bt*S, C) slab ---
    n2 = _layernorm(x, ln2_g_ref[...], ln2_b_ref[...]).astype(jnp.bfloat16)
    h = jnp.dot(n2, w1c_ref[...], preferred_element_type=jnp.float32) + b1c_ref[...]  # (Bt*S, D_c)
    g = _gelu_exact(h).astype(jnp.bfloat16)
    c = jnp.dot(g, w2c_ref[...], preferred_element_type=jnp.float32) + b2c_ref[...]   # (Bt*S, C)

    o_ref[...] = (x + c).reshape(Bt, S, C).astype(o_ref.dtype)


def _choose_batch_tile(B, S, C, D_s, D_c, act_budget_bytes=4 * 1024 * 1024):
    # Rough f32 working set per batch element inside the kernel.
    per_b = 4 * S * (4 * C + D_c + 2 * D_s)
    bt = max(1, min(B, act_budget_bytes // max(per_b, 1)))
    while B % bt:                       # exact tiling of the batch axis
        bt -= 1
    if B >= 2 and B // bt < 2:          # keep >= 2 parallel steps (v7x: 2 TCs)
        bt = max(1, B // 2)
        while B % bt:
            bt -= 1
    return bt


def mixer_layer(x, params, batch_tile=None):
    """x: (B, S, C). params: PyTorch-layout weights (see init_params)."""
    B, S, C = x.shape
    D_s = params["w1s"].shape[0]
    D_c = params["w1c"].shape[0]
    wdt = jnp.bfloat16

    Bt = batch_tile if batch_tile is not None else _choose_batch_tile(B, S, C, D_s, D_c)
    assert B % Bt == 0, "batch tile must divide B"

    # Host-side layout fixes (free): the kernel does zero transposes.
    plist = [
        params["ln1_g"].reshape(1, C).astype(jnp.float32),
        params["ln1_b"].reshape(1, C).astype(jnp.float32),
        params["ln2_g"].reshape(1, C).astype(jnp.float32),
        params["ln2_b"].reshape(1, C).astype(jnp.float32),
        params["w1s"].astype(wdt),                          # (D_s, S)  out,in
        params["b1s"].reshape(D_s, 1).astype(jnp.float32),
        params["w2s"].astype(wdt),                          # (S, D_s)  out,in
        params["b2s"].reshape(S, 1).astype(jnp.float32),
        params["w1c"].T.astype(wdt),                        # (C, D_c)  pre-transposed
        params["b1c"].reshape(1, D_c).astype(jnp.float32),
        params["w2c"].T.astype(wdt),                        # (D_c, C)  pre-transposed
        params["b2c"].reshape(1, C).astype(jnp.float32),
    ]
    param_specs = [pl.BlockSpec(p.shape, lambda b: (0, 0)) for p in plist]

    # VMEM budget: double-buffered activation blocks + resident params.
    block_bytes = Bt * S * C * x.dtype.itemsize
    param_bytes = sum(int(p.size) * p.dtype.itemsize for p in plist)
    vmem_limit = int(max(32 * 1024 * 1024,
                         min(48 * 1024 * 1024,
                             8 * block_bytes + 4 * param_bytes + (4 << 20))))

    flops = 4 * B * S * C * (D_s + D_c) + 16 * B * S * C
    transcendentals = B * (C * D_s + S * D_c)
    bytes_accessed = 2 * B * S * C * x.dtype.itemsize + param_bytes

    return pl.pallas_call(
        mixer_kernel,
        out_shape=jax.ShapeDtypeStruct((B, S, C), x.dtype),
        grid=(B // Bt,),
        in_specs=[pl.BlockSpec((Bt, S, C), lambda b: (b, 0, 0))] + param_specs,
        out_specs=pl.BlockSpec((Bt, S, C), lambda b: (b, 0, 0)),
        compiler_params=pltpu.CompilerParams(
            dimension_semantics=("parallel",),
            vmem_limit_bytes=vmem_limit),
        cost_estimate=pl.CostEstimate(
            flops=flops,
            transcendentals=transcendentals,
            bytes_accessed=bytes_accessed),
    )(x, *plist)


def init_params(key, channel_dim, num_patch, mlp_dim_c, mlp_dim_s):
    """Deterministic init, PyTorch layout: weights (out, in), biases (out,)."""
    ks = jax.random.split(key, 4)

    def lin(k, out_dim, in_dim):
        kw, kb = jax.random.split(k)
        bound = 1.0 / math.sqrt(in_dim)
        w = jax.random.uniform(kw, (out_dim, in_dim), jnp.float32, -bound, bound)
        b = jax.random.uniform(kb, (out_dim,), jnp.float32, -bound, bound)
        return w, b

    w1s, b1s = lin(ks[0], mlp_dim_s, num_patch)     # token mixing dense_1
    w2s, b2s = lin(ks[1], num_patch, mlp_dim_s)     # token mixing dense_2
    w1c, b1c = lin(ks[2], mlp_dim_c, channel_dim)   # channel mixing dense_1
    w2c, b2c = lin(ks[3], channel_dim, mlp_dim_c)   # channel mixing dense_2

    return {
        "ln1_g": jnp.ones((channel_dim,), jnp.float32),
        "ln1_b": jnp.zeros((channel_dim,), jnp.float32),
        "ln2_g": jnp.ones((channel_dim,), jnp.float32),
        "ln2_b": jnp.zeros((channel_dim,), jnp.float32),
        "w1s": w1s, "b1s": b1s, "w2s": w2s, "b2s": b2s,
        "w1c": w1c, "b1c": b1c, "w2c": w2c, "b2c": b2c,
    }


def _mm_bf16(a, w):
    # Mirrors the kernel's matmul numerics: bf16 operands, f32 accumulation.
    return jnp.dot(a.astype(jnp.bfloat16), w.astype(jnp.bfloat16),
                   preferred_element_type=jnp.float32)


def _mm_f32(a, w):
    return jnp.dot(a, w, preferred_element_type=jnp.float32)


def mixer_layer_ref(x, p, matmul=_mm_bf16):
    """Pure-JAX reference (PyTorch semantics), matmul precision is pluggable."""
    def ln(v, g, b, eps=1e-5):
        mu = jnp.mean(v, -1, keepdims=True)
        var = jnp.mean((v - mu) ** 2, -1, keepdims=True)
        return (v - mu) / jnp.sqrt(var + eps) * g + b

    n1 = ln(x, p["ln1_g"], p["ln1_b"])
    y = jnp.swapaxes(n1, 1, 2)                                               # (B, C, S)
    t = matmul(_gelu_exact(matmul(y, p["w1s"].T) + p["b1s"]), p["w2s"].T) + p["b2s"]
    x = x + jnp.swapaxes(t, 1, 2)
    n2 = ln(x, p["ln2_g"], p["ln2_b"])
    c = matmul(_gelu_exact(matmul(n2, p["w1c"].T) + p["b1c"]), p["w2c"].T) + p["b2c"]
    return x + c


if __name__ == "__main__":
    B, S, C = 2, 8, 16          # batch, num_patch, channel_dim
    D_c, D_s = 32, 24           # mlp_dimension_C, mlp_dimension_S

    key = jax.random.PRNGKey(0)
    kx, kp = jax.random.split(key)
    x = jax.random.normal(kx, (B, S, C), jnp.float32)
    params = init_params(kp, C, S, D_c, D_s)

    out = jax.block_until_ready(mixer_layer(x, params))
    assert out.shape == (B, S, C)

    # Tight check vs. a reference that mirrors the kernel's bf16-matmul path.
    ref_bf16 = mixer_layer_ref(x, params, matmul=_mm_bf16)
    assert jnp.allclose(out, ref_bf16, atol=1e-3, rtol=1e-3), "mismatch vs bf16 reference"

    # Loose sanity check vs. the exact-f32 PyTorch-module semantics.
    ref_f32 = mixer_layer_ref(x, params, matmul=_mm_f32)
    assert jnp.allclose(out, ref_f32, atol=1e-1, rtol=1e-1), "mismatch vs f32 reference"

    print("KERNEL_OK")
</pallas_src>

<mosaic_0001>
module attributes {stable_mosaic.version = 11 : i64} {
  func.func @mixer_kernel(%arg0: i32, %arg1: memref<1x8x16xf32, #tpu.memory_space<vmem>>, %arg2: memref<1x16xf32, #tpu.memory_space<vmem>>, %arg3: memref<1x16xf32, #tpu.memory_space<vmem>>, %arg4: memref<1x16xf32, #tpu.memory_space<vmem>>, %arg5: memref<1x16xf32, #tpu.memory_space<vmem>>, %arg6: memref<24x8xbf16, #tpu.memory_space<vmem>>, %arg7: memref<24x1xf32, #tpu.memory_space<vmem>>, %arg8: memref<8x24xbf16, #tpu.memory_space<vmem>>, %arg9: memref<8x1xf32, #tpu.memory_space<vmem>>, %arg10: memref<16x32xbf16, #tpu.memory_space<vmem>>, %arg11: memref<1x32xf32, #tpu.memory_space<vmem>>, %arg12: memref<32x16xbf16, #tpu.memory_space<vmem>>, %arg13: memref<1x16xf32, #tpu.memory_space<vmem>>, %arg14: memref<1x8x16xf32, #tpu.memory_space<vmem>>) attributes {dimension_semantics = [#tpu.dimension_semantics<parallel>], iteration_bounds = array<i64: 2>, scalar_prefetch = 0 : i64, scratch_operands = 0 : i64, tpu.core_type = #tpu.core_type<tc>, window_params = [{transform_indices = @transform_0, window_bounds = array<i64: 1, 8, 16>}, {pipeline_mode = #tpu.pipeline_mode<synchronous>, transform_indices = @transform_1, window_bounds = array<i64: 1, 16>}, {pipeline_mode = #tpu.pipeline_mode<synchronous>, transform_indices = @transform_2, window_bounds = array<i64: 1, 16>}, {pipeline_mode = #tpu.pipeline_mode<synchronous>, transform_indices = @transform_3, window_bounds = array<i64: 1, 16>}, {pipeline_mode = #tpu.pipeline_mode<synchronous>, transform_indices = @transform_4, window_bounds = array<i64: 1, 16>}, {pipeline_mode = #tpu.pipeline_mode<synchronous>, transform_indices = @transform_5, window_bounds = array<i64: 24, 8>}, {pipeline_mode = #tpu.pipeline_mode<synchronous>, transform_indices = @transform_6, window_bounds = array<i64: 24, 1>}, {pipeline_mode = #tpu.pipeline_mode<synchronous>, transform_indices = @transform_7, window_bounds = array<i64: 8, 24>}, {pipeline_mode = #tpu.pipeline_mode<synchronous>, transform_indices = @transform_8, window_bounds = array<i64: 8, 1>}, {pipeline_mode = #tpu.pipeline_mode<synchronous>, transform_indices = @transform_9, window_bounds = array<i64: 16, 32>}, {pipeline_mode = #tpu.pipeline_mode<synchronous>, transform_indices = @transform_10, window_bounds = array<i64: 1, 32>}, {pipeline_mode = #tpu.pipeline_mode<synchronous>, transform_indices = @transform_11, window_bounds = array<i64: 32, 16>}, {pipeline_mode = #tpu.pipeline_mode<synchronous>, transform_indices = @transform_12, window_bounds = array<i64: 1, 16>}, {transform_indices = @transform_13, window_bounds = array<i64: 1, 8, 16>}]} {
    %c0 = arith.constant 0 : index
    %c0_0 = arith.constant 0 : index
    %c0_1 = arith.constant 0 : index
    %0 = vector.load %arg1[%c0, %c0_0, %c0_1] : memref<1x8x16xf32, #tpu.memory_space<vmem>>, vector<1x8x16xf32>
    %1 = vector.shape_cast %0 : vector<1x8x16xf32> to vector<8x16xf32>
    %c0_2 = arith.constant 0 : index
    %c0_3 = arith.constant 0 : index
    %2 = vector.load %arg2[%c0_2, %c0_3] : memref<1x16xf32, #tpu.memory_space<vmem>>, vector<1x16xf32>
    %c0_4 = arith.constant 0 : index
    %c0_5 = arith.constant 0 : index
    %3 = vector.load %arg3[%c0_4, %c0_5] : memref<1x16xf32, #tpu.memory_space<vmem>>, vector<1x16xf32>
    %cst = arith.constant dense<0.000000e+00> : vector<8xf32>
    %4 = vector.multi_reduction <add>, %1, %cst [1] : vector<8x16xf32> to vector<8xf32>
    %5 = vector.shape_cast %4 : vector<8xf32> to vector<8x1xf32>
    %cst_6 = arith.constant 1.600000e+01 : f32
    %6 = vector.broadcast %cst_6 : f32 to vector<8x1xf32>
    %7 = arith.divf %5, %6 : vector<8x1xf32>
    %8 = vector.broadcast %7 : vector<8x1xf32> to vector<8x16xf32>
    %9 = arith.subf %1, %8 : vector<8x16xf32>
    %10 = arith.mulf %9, %9 : vector<8x16xf32>
    %cst_7 = arith.constant dense<0.000000e+00> : vector<8xf32>
    %11 = vector.multi_reduction <add>, %10, %cst_7 [1] : vector<8x16xf32> to vector<8xf32>
    %12 = vector.shape_cast %11 : vector<8xf32> to vector<8x1xf32>
    %cst_8 = arith.constant 1.600000e+01 : f32
    %13 = vector.broadcast %cst_8 : f32 to vector<8x1xf32>
    %14 = arith.divf %12, %13 : vector<8x1xf32>
    %15 = vector.broadcast %7 : vector<8x1xf32> to vector<8x16xf32>
    %16 = arith.subf %1, %15 : vector<8x16xf32>
    %cst_9 = arith.constant 9.99999974E-6 : f32
    %17 = vector.broadcast %cst_9 : f32 to vector<8x1xf32>
    %18 = arith.addf %14, %17 : vector<8x1xf32>
    %19 = math.rsqrt %18 : vector<8x1xf32>
    %20 = vector.broadcast %19 : vector<8x1xf32> to vector<8x16xf32>
    %21 = arith.mulf %16, %20 : vector<8x16xf32>
    %22 = vector.broadcast %2 : vector<1x16xf32> to vector<8x16xf32>
    %23 = arith.mulf %21, %22 : vector<8x16xf32>
    %24 = vector.broadcast %3 : vector<1x16xf32> to vector<8x16xf32>
    %25 = arith.addf %23, %24 : vector<8x16xf32>
    %26 = arith.truncf %25 : vector<8x16xf32> to vector<8x16xbf16>
    %c0_10 = arith.constant 0 : index
    %c0_11 = arith.constant 0 : index
    %27 = vector.load %arg6[%c0_10, %c0_11] : memref<24x8xbf16, #tpu.memory_space<vmem>>, vector<24x8xbf16>
    %c0_12 = arith.constant 0 : index
    %c0_13 = arith.constant 0 : index
    %28 = vector.load %arg8[%c0_12, %c0_13] : memref<8x24xbf16, #tpu.memory_space<vmem>>, vector<8x24xbf16>
    %c0_14 = arith.constant 0 : index
    %c0_15 = arith.constant 0 : index
    %29 = vector.load %arg7[%c0_14, %c0_15] : memref<24x1xf32, #tpu.memory_space<vmem>>, vector<24x1xf32>
    %c0_16 = arith.constant 0 : index
    %c0_17 = arith.constant 0 : index
    %30 = vector.load %arg9[%c0_16, %c0_17] : memref<8x1xf32, #tpu.memory_space<vmem>>, vector<8x1xf32>
    %cst_18 = arith.constant dense<0.000000e+00> : vector<24x16xf32>
    %31 = tpu.matmul %27, %26, %cst_18 {dimension_numbers = #tpu.dot_dimension_numbers<[1], [0], [0], [1], [0, 0, 1, 1], [], []>} : vector<24x8xbf16>, vector<8x16xbf16>, vector<24x16xf32> -> vector<24x16xf32>
    %32 = vector.broadcast %29 : vector<24x1xf32> to vector<24x16xf32>
    %33 = arith.addf %31, %32 : vector<24x16xf32>
    %cst_19 = arith.constant 5.000000e-01 : f32
    %34 = vector.broadcast %cst_19 : f32 to vector<24x16xf32>
    %35 = arith.mulf %34, %33 : vector<24x16xf32>
    %cst_20 = arith.constant 0.707106769 : f32
    %36 = vector.broadcast %cst_20 : f32 to vector<24x16xf32>
    %37 = arith.mulf %33, %36 : vector<24x16xf32>
    %38 = math.erf %37 : vector<24x16xf32>
    %cst_21 = arith.constant 1.000000e+00 : f32
    %39 = vector.broadcast %cst_21 : f32 to vector<24x16xf32>
    %40 = arith.addf %39, %38 : vector<24x16xf32>
    %41 = arith.mulf %35, %40 : vector<24x16xf32>
    %42 = arith.truncf %41 : vector<24x16xf32> to vector<24x16xbf16>
    %cst_22 = arith.constant dense<0.000000e+00> : vector<8x16xf32>
    %43 = tpu.matmul %28, %42, %cst_22 {dimension_numbers = #tpu.dot_dimension_numbers<[1], [0], [0], [1], [0, 0, 1, 1], [], []>} : vector<8x24xbf16>, vector<24x16xbf16>, vector<8x16xf32> -> vector<8x16xf32>
    %44 = vector.broadcast %30 : vector<8x1xf32> to vector<8x16xf32>
    %45 = arith.addf %43, %44 : vector<8x16xf32>
    %46 = arith.addf %1, %45 : vector<8x16xf32>
    %c0_23 = arith.constant 0 : index
    %c0_24 = arith.constant 0 : index
    %47 = vector.load %arg4[%c0_23, %c0_24] : memref<1x16xf32, #tpu.memory_space<vmem>>, vector<1x16xf32>
    %c0_25 = arith.constant 0 : index
    %c0_26 = arith.constant 0 : index
    %48 = vector.load %arg5[%c0_25, %c0_26] : memref<1x16xf32, #tpu.memory_space<vmem>>, vector<1x16xf32>
    %cst_27 = arith.constant dense<0.000000e+00> : vector<8xf32>
    %49 = vector.multi_reduction <add>, %46, %cst_27 [1] : vector<8x16xf32> to vector<8xf32>
    %50 = vector.shape_cast %49 : vector<8xf32> to vector<8x1xf32>
    %cst_28 = arith.constant 1.600000e+01 : f32
    %51 = vector.broadcast %cst_28 : f32 to vector<8x1xf32>
    %52 = arith.divf %50, %51 : vector<8x1xf32>
    %53 = vector.broadcast %52 : vector<8x1xf32> to vector<8x16xf32>
    %54 = arith.subf %46, %53 : vector<8x16xf32>
    %55 = arith.mulf %54, %54 : vector<8x16xf32>
    %cst_29 = arith.constant dense<0.000000e+00> : vector<8xf32>
    %56 = vector.multi_reduction <add>, %55, %cst_29 [1] : vector<8x16xf32> to vector<8xf32>
    %57 = vector.shape_cast %56 : vector<8xf32> to vector<8x1xf32>
    %cst_30 = arith.constant 1.600000e+01 : f32
    %58 = vector.broadcast %cst_30 : f32 to vector<8x1xf32>
    %59 = arith.divf %57, %58 : vector<8x1xf32>
    %60 = vector.broadcast %52 : vector<8x1xf32> to vector<8x16xf32>
    %61 = arith.subf %46, %60 : vector<8x16xf32>
    %cst_31 = arith.constant 9.99999974E-6 : f32
    %62 = vector.broadcast %cst_31 : f32 to vector<8x1xf32>
    %63 = arith.addf %59, %62 : vector<8x1xf32>
    %64 = math.rsqrt %63 : vector<8x1xf32>
    %65 = vector.broadcast %64 : vector<8x1xf32> to vector<8x16xf32>
    %66 = arith.mulf %61, %65 : vector<8x16xf32>
    %67 = vector.broadcast %47 : vector<1x16xf32> to vector<8x16xf32>
    %68 = arith.mulf %66, %67 : vector<8x16xf32>
    %69 = vector.broadcast %48 : vector<1x16xf32> to vector<8x16xf32>
    %70 = arith.addf %68, %69 : vector<8x16xf32>
    %71 = arith.truncf %70 : vector<8x16xf32> to vector<8x16xbf16>
    %c0_32 = arith.constant 0 : index
    %c0_33 = arith.constant 0 : index
    %72 = vector.load %arg10[%c0_32, %c0_33] : memref<16x32xbf16, #tpu.memory_space<vmem>>, vector<16x32xbf16>
    %cst_34 = arith.constant dense<0.000000e+00> : vector<8x32xf32>
    %73 = tpu.matmul %71, %72, %cst_34 {dimension_numbers = #tpu.dot_dimension_numbers<[1], [0], [0], [1], [0, 0, 1, 1], [], []>} : vector<8x16xbf16>, vector<16x32xbf16>, vector<8x32xf32> -> vector<8x32xf32>
    %c0_35 = arith.constant 0 : index
    %c0_36 = arith.constant 0 : index
    %74 = vector.load %arg11[%c0_35, %c0_36] : memref<1x32xf32, #tpu.memory_space<vmem>>, vector<1x32xf32>
    %75 = vector.broadcast %74 : vector<1x32xf32> to vector<8x32xf32>
    %76 = arith.addf %73, %75 : vector<8x32xf32>
    %cst_37 = arith.constant 5.000000e-01 : f32
    %77 = vector.broadcast %cst_37 : f32 to vector<8x32xf32>
    %78 = arith.mulf %77, %76 : vector<8x32xf32>
    %cst_38 = arith.constant 0.707106769 : f32
    %79 = vector.broadcast %cst_38 : f32 to vector<8x32xf32>
    %80 = arith.mulf %76, %79 : vector<8x32xf32>
    %81 = math.erf %80 : vector<8x32xf32>
    %cst_39 = arith.constant 1.000000e+00 : f32
    %82 = vector.broadcast %cst_39 : f32 to vector<8x32xf32>
    %83 = arith.addf %82, %81 : vector<8x32xf32>
    %84 = arith.mulf %78, %83 : vector<8x32xf32>
    %85 = arith.truncf %84 : vector<8x32xf32> to vector<8x32xbf16>
    %c0_40 = arith.constant 0 : index
    %c0_41 = arith.constant 0 : index
    %86 = vector.load %arg12[%c0_40, %c0_41] : memref<32x16xbf16, #tpu.memory_space<vmem>>, vector<32x16xbf16>
    %cst_42 = arith.constant dense<0.000000e+00> : vector<8x16xf32>
    %87 = tpu.matmul %85, %86, %cst_42 {dimension_numbers = #tpu.dot_dimension_numbers<[1], [0], [0], [1], [0, 0, 1, 1], [], []>} : vector<8x32xbf16>, vector<32x16xbf16>, vector<8x16xf32> -> vector<8x16xf32>
    %c0_43 = arith.constant 0 : index
    %c0_44 = arith.constant 0 : index
    %88 = vector.load %arg13[%c0_43, %c0_44] : memref<1x16xf32, #tpu.memory_space<vmem>>, vector<1x16xf32>
    %89 = vector.broadcast %88 : vector<1x16xf32> to vector<8x16xf32>
    %90 = arith.addf %87, %89 : vector<8x16xf32>
    %91 = arith.addf %46, %90 : vector<8x16xf32>
    %92 = vector.shape_cast %91 : vector<8x16xf32> to vector<1x8x16xf32>
    %c0_45 = arith.constant 0 : index
    %c0_46 = arith.constant 0 : index
    %c0_47 = arith.constant 0 : index
    %93 = vector.load %arg14[%c0_45, %c0_46, %c0_47] : memref<1x8x16xf32, #tpu.memory_space<vmem>>, vector<1x8x16xf32>
    tpu.vector_store %arg14[%c0_45, %c0_46, %c0_47], %92 {strides = array<i32>} : memref<1x8x16xf32, #tpu.memory_space<vmem>>, vector<1x8x16xf32>,
    return
  }
  func.func @transform_0(%arg0: i32) -> (i32, i32, i32) {
    %c0_i32 = arith.constant 0 : i32
    %c0_i32_0 = arith.constant 0 : i32
    %c0_i32_1 = arith.constant 0 : i32
    return %arg0, %c0_i32, %c0_i32_0 : i32, i32, i32
  }
  func.func @transform_1(%arg0: i32) -> (i32, i32) {
    %c0_i32 = arith.constant 0 : i32
    %c0_i32_0 = arith.constant 0 : i32
    %c0_i32_1 = arith.constant 0 : i32
    return %c0_i32, %c0_i32_0 : i32, i32
  }
  func.func @transform_2(%arg0: i32) -> (i32, i32) {
    %c0_i32 = arith.constant 0 : i32
    %c0_i32_0 = arith.constant 0 : i32
    %c0_i32_1 = arith.constant 0 : i32
    return %c0_i32, %c0_i32_0 : i32, i32
  }
  func.func @transform_3(%arg0: i32) -> (i32, i32) {
    %c0_i32 = arith.constant 0 : i32
    %c0_i32_0 = arith.constant 0 : i32
    %c0_i32_1 = arith.constant 0 : i32
    return %c0_i32, %c0_i32_0 : i32, i32
  }
  func.func @transform_4(%arg0: i32) -> (i32, i32) {
    %c0_i32 = arith.constant 0 : i32
    %c0_i32_0 = arith.constant 0 : i32
    %c0_i32_1 = arith.constant 0 : i32
    return %c0_i32, %c0_i32_0 : i32, i32
  }
  func.func @transform_5(%arg0: i32) -> (i32, i32) {
    %c0_i32 = arith.constant 0 : i32
    %c0_i32_0 = arith.constant 0 : i32
    %c0_i32_1 = arith.constant 0 : i32
    return %c0_i32, %c0_i32_0 : i32, i32
  }
  func.func @transform_6(%arg0: i32) -> (i32, i32) {
    %c0_i32 = arith.constant 0 : i32
    %c0_i32_0 = arith.constant 0 : i32
    %c0_i32_1 = arith.constant 0 : i32
    return %c0_i32, %c0_i32_0 : i32, i32
  }
  func.func @transform_7(%arg0: i32) -> (i32, i32) {
    %c0_i32 = arith.constant 0 : i32
    %c0_i32_0 = arith.constant 0 : i32
    %c0_i32_1 = arith.constant 0 : i32
    return %c0_i32, %c0_i32_0 : i32, i32
  }
  func.func @transform_8(%arg0: i32) -> (i32, i32) {
    %c0_i32 = arith.constant 0 : i32
    %c0_i32_0 = arith.constant 0 : i32
    %c0_i32_1 = arith.constant 0 : i32
    return %c0_i32, %c0_i32_0 : i32, i32
  }
  func.func @transform_9(%arg0: i32) -> (i32, i32) {
    %c0_i32 = arith.constant 0 : i32
    %c0_i32_0 = arith.constant 0 : i32
    %c0_i32_1 = arith.constant 0 : i32
    return %c0_i32, %c0_i32_0 : i32, i32
  }
  func.func @transform_10(%arg0: i32) -> (i32, i32) {
    %c0_i32 = arith.constant 0 : i32
    %c0_i32_0 = arith.constant 0 : i32
    %c0_i32_1 = arith.constant 0 : i32
    return %c0_i32, %c0_i32_0 : i32, i32
  }
  func.func @transform_11(%arg0: i32) -> (i32, i32) {
    %c0_i32 = arith.constant 0 : i32
    %c0_i32_0 = arith.constant 0 : i32
    %c0_i32_1 = arith.constant 0 : i32
    return %c0_i32, %c0_i32_0 : i32, i32
  }
  func.func @transform_12(%arg0: i32) -> (i32, i32) {
    %c0_i32 = arith.constant 0 : i32
    %c0_i32_0 = arith.constant 0 : i32
    %c0_i32_1 = arith.constant 0 : i32
    return %c0_i32, %c0_i32_0 : i32, i32
  }
  func.func @transform_13(%arg0: i32) -> (i32, i32, i32) {
    %c0_i32 = arith.constant 0 : i32
    %c0_i32_0 = arith.constant 0 : i32
    %c0_i32_1 = arith.constant 0 : i32
    return %arg0, %c0_i32, %c0_i32_0 : i32, i32, i32
  }
}

</mosaic_0001>

<llo_original>
// kernel: tpu_custom_call.1
$region0: #{tpu_custom_call.1}
  #allocation0 [shape = 'u32[]', space=smem, size = 0x4, offset = 0x4, fixed_abs, tag = 'smem constant byte address 0x4 - core index']
  #allocation1 [shape = 'u32[72,128]{1,0:T(1,128)}', space=vmem, size = 0x9000, scoped, tag = 'internal scratch']
  %s0 = inlined_call_operand.vmem [shape: f32[2,8,16], index: 0, kind: input, shape index: {}]
  %s1 = inlined_call_operand.vmem [shape: f32[1,16], index: 1, kind: input, shape index: {}]
  %s2 = inlined_call_operand.vmem [shape: f32[1,16], index: 2, kind: input, shape index: {}]
  %s3 = inlined_call_operand.vmem [shape: f32[1,16], index: 3, kind: input, shape index: {}]
  %s4 = inlined_call_operand.vmem [shape: f32[1,16], index: 4, kind: input, shape index: {}]
  %s5 = inlined_call_operand.vmem [shape: bf16[24,8], index: 5, kind: input, shape index: {}]
  %s6 = inlined_call_operand.vmem [shape: f32[24,1], index: 6, kind: input, shape index: {}]
  %s7 = inlined_call_operand.vmem [shape: bf16[8,24], index: 7, kind: input, shape index: {}]
  %s8 = inlined_call_operand.vmem [shape: f32[8,1], index: 8, kind: input, shape index: {}]
  %s9 = inlined_call_operand.vmem [shape: bf16[16,32], index: 9, kind: input, shape index: {}]
  %s10 = inlined_call_operand.vmem [shape: f32[1,32], index: 10, kind: input, shape index: {}]
  %s11 = inlined_call_operand.vmem [shape: bf16[32,16], index: 11, kind: input, shape index: {}]
  %s12 = inlined_call_operand.vmem [shape: f32[1,16], index: 12, kind: input, shape index: {}]
  %s13 = inlined_call_operand.hbm [shape: f32[2,8,16], index: 13, kind: output, shape index: {}]
  %s14 = sld [smem:[#allocation0]]
  $region85: #{tpu_custom_call.1} parent=0
    _
  %s16 = ssub.s32 1, %s14
  %s17 = scalar_select 0, %s16, %s14
  $region1: #{tpu_custom_call.1} parent=0
    #allocation2 [shape = 'u8[8192]{0}', space=vmem, size = 0x2000, scoped, tag = 'output window, operand 0']
    #allocation3 [shape = 's32[2]{0}', space=sflag, size = 0x8, scoped, tag = 'scoped memory for tpu_custom_call.1']
    %18 = vsyncpa [#allocation3], 0
    %s19 = scalar_lea.sflag [#allocation3], 1
    %20 = vsyncpa %s19, 0
    loop: start=0, step=1, limit=4
    $region2: #{tpu_custom_call.1} parent=1 // loop_pre_header
      _
    $region3: #{tpu_custom_call.1} parent=1 // loop_header
      %s22 = sphi 0, %s26
      %p23 = scmp.ge.s32.totalorder %s22, 4
      %s32 = sphi 0, %s34
      %s35 = sphi 0, %s32
      %s36 = sphi 0, %s35
      %s52 = sphi 0, %s36
      %s56 = sphi 0, %s56
      %s58 = sphi 0, %s56
      %s59 = sphi 0, %s58
      %s73 = sphi 0, %s59
      %s77 = sphi 0, %s77
      %s79 = sphi 0, %s77
      %s80 = sphi 0, %s79
      %s94 = sphi 0, %s80
      %s98 = sphi 0, %s98
      %s100 = sphi 0, %s98
      %s101 = sphi 0, %s100
      %s115 = sphi 0, %s101
      %s119 = sphi 0, %s119
      %s121 = sphi 0, %s119
      %s122 = sphi 0, %s121
      %s136 = sphi 0, %s122
      %s140 = sphi 0, %s140
      %s142 = sphi 0, %s140
      %s143 = sphi 0, %s142
      %s157 = sphi 0, %s143
      %s161 = sphi 0, %s161
      %s163 = sphi 0, %s161
      %s164 = sphi 0, %s163
      %s178 = sphi 0, %s164
      %s182 = sphi 0, %s182
      %s184 = sphi 0, %s182
      %s185 = sphi 0, %s184
      %s199 = sphi 0, %s185
      %s203 = sphi 0, %s203
      %s205 = sphi 0, %s203
      %s206 = sphi 0, %s205
      %s220 = sphi 0, %s206
      %s224 = sphi 0, %s224
      %s226 = sphi 0, %s224
      %s227 = sphi 0, %s226
      %s241 = sphi 0, %s227
      %s245 = sphi 0, %s245
      %s247 = sphi 0, %s245
      %s248 = sphi 0, %s247
      %s262 = sphi 0, %s248
      %s266 = sphi 0, %s266
      %s268 = sphi 0, %s266
      %s269 = sphi 0, %s268
      %s283 = sphi 0, %s269
      %s287 = sphi 0, %s287
      %s289 = sphi 0, %s287
      %s290 = sphi 0, %s289
      %s304 = sphi 0, %s290
      %s310 = sphi 0, %s312
      %s313 = sphi 0, %s310
      %s314 = sphi 0, %s313
      %s330 = sphi 0, %s314
    $region4: #{tpu_custom_call.1} parent=1 // loop_header_branch
      %25 = sbr.rel (%p23) target = $region8
    $region5: #{tpu_custom_call.1} parent=1 // loop_body
      %s27 = ssub.s32 %s22, 1
      %s28 = ssub.s32 %s22, 2
      %s29 = sadd.s32 %s22, 1
      %s30 = ssub.s32 %s22, %s29
      %p31 = scmp.eq.s32.totalorder %s30, 0
      %s33 = sadd.s32 %s32, 1
      %s34 = scalar_select %p31, %s32, %s33
      %p37 = pneg %p31
      %p38 = scmp.eq.s32.totalorder %s22, 1
      %p39 = por %p37, %p38
      %p40 = scmp.ne.s32.totalorder %s32, %s35
      %p41 = scmp.eq.s32.totalorder %s22, 0
      %p42 = por %p40, %p41
      %p43 = scmp.ne.s32.totalorder %s32, %s35
      %p44 = scmp.eq.s32.totalorder %s27, 1
      %p45 = por %p43, %p44
      %p46 = scmp.ne.s32.totalorder %s35, %s36
      %p47 = scmp.eq.s32.totalorder %s27, 0
      %p48 = por %p46, %p47
      %p49 = scmp.ne.s32.totalorder %s35, %s36
      %p50 = scmp.eq.s32.totalorder %s28, 1
      %p51 = por %p49, %p50
      %p53 = scmp.ne.s32.totalorder %s36, %s52
      %p54 = scmp.eq.s32.totalorder %s28, 0
      %p55 = por %p53, %p54
      %s57 = sadd.s32 %s56, 1
      %p60 = scmp.eq.s32.totalorder %s22, 1
      %p61 = scmp.ne.s32.totalorder %s56, %s58
      %p62 = scmp.eq.s32.totalorder %s22, 0
      %p63 = por %p61, %p62
      %p64 = scmp.ne.s32.totalorder %s56, %s58
      %p65 = scmp.eq.s32.totalorder %s27, 1
      %p66 = por %p64, %p65
      %p67 = scmp.ne.s32.totalorder %s58, %s59
      %p68 = scmp.eq.s32.totalorder %s27, 0
      %p69 = por %p67, %p68
      %p70 = scmp.ne.s32.totalorder %s58, %s59
      %p71 = scmp.eq.s32.totalorder %s28, 1
      %p72 = por %p70, %p71
      %p74 = scmp.ne.s32.totalorder %s59, %s73
      %p75 = scmp.eq.s32.totalorder %s28, 0
      %p76 = por %p74, %p75
      %s78 = sadd.s32 %s77, 1
      %p81 = scmp.eq.s32.totalorder %s22, 1
      %p82 = scmp.ne.s32.totalorder %s77, %s79
      %p83 = scmp.eq.s32.totalorder %s22, 0
      %p84 = por %p82, %p83
      %p85 = scmp.ne.s32.totalorder %s77, %s79
      %p86 = scmp.eq.s32.totalorder %s27, 1
      %p87 = por %p85, %p86
      %p88 = scmp.ne.s32.totalorder %s79, %s80
      %p89 = scmp.eq.s32.totalorder %s27, 0
      %p90 = por %p88, %p89
      %p91 = scmp.ne.s32.totalorder %s79, %s80
      %p92 = scmp.eq.s32.totalorder %s28, 1
      %p93 = por %p91, %p92
      %p95 = scmp.ne.s32.totalorder %s80, %s94
      %p96 = scmp.eq.s32.totalorder %s28, 0
      %p97 = por %p95, %p96
      %s99 = sadd.s32 %s98, 1
      %p102 = scmp.eq.s32.totalorder %s22, 1
      %p103 = scmp.ne.s32.totalorder %s98, %s100
      %p104 = scmp.eq.s32.totalorder %s22, 0
      %p105 = por %p103, %p104
      %p106 = scmp.ne.s32.totalorder %s98, %s100
      %p107 = scmp.eq.s32.totalorder %s27, 1
      %p108 = por %p106, %p107
      %p109 = scmp.ne.s32.totalorder %s100, %s101
      %p110 = scmp.eq.s32.totalorder %s27, 0
      %p111 = por %p109, %p110
      %p112 = scmp.ne.s32.totalorder %s100, %s101
      %p113 = scmp.eq.s32.totalorder %s28, 1
      %p114 = por %p112, %p113
      %p116 = scmp.ne.s32.totalorder %s101, %s115
      %p117 = scmp.eq.s32.totalorder %s28, 0
      %p118 = por %p116, %p117
      %s120 = sadd.s32 %s119, 1
      %p123 = scmp.eq.s32.totalorder %s22, 1
      %p124 = scmp.ne.s32.totalorder %s119, %s121
      %p125 = scmp.eq.s32.totalorder %s22, 0
      %p126 = por %p124, %p125
      %p127 = scmp.ne.s32.totalorder %s119, %s121
      %p128 = scmp.eq.s32.totalorder %s27, 1
      %p129 = por %p127, %p128
      %p130 = scmp.ne.s32.totalorder %s121, %s122
      %p131 = scmp.eq.s32.totalorder %s27, 0
      %p132 = por %p130, %p131
      %p133 = scmp.ne.s32.totalorder %s121, %s122
      %p134 = scmp.eq.s32.totalorder %s28, 1
      %p135 = por %p133, %p134
      %p137 = scmp.ne.s32.totalorder %s122, %s136
      %p138 = scmp.eq.s32.totalorder %s28, 0
      %p139 = por %p137, %p138
      %s141 = sadd.s32 %s140, 1
      %p144 = scmp.eq.s32.totalorder %s22, 1
      %p145 = scmp.ne.s32.totalorder %s140, %s142
      %p146 = scmp.eq.s32.totalorder %s22, 0
      %p147 = por %p145, %p146
      %p148 = scmp.ne.s32.totalorder %s140, %s142
      %p149 = scmp.eq.s32.totalorder %s27, 1
      %p150 = por %p148, %p149
      %p151 = scmp.ne.s32.totalorder %s142, %s143
      %p152 = scmp.eq.s32.totalorder %s27, 0
      %p153 = por %p151, %p152
      %p154 = scmp.ne.s32.totalorder %s142, %s143
      %p155 = scmp.eq.s32.totalorder %s28, 1
      %p156 = por %p154, %p155
      %p158 = scmp.ne.s32.totalorder %s143, %s157
      %p159 = scmp.eq.s32.totalorder %s28, 0
      %p160 = por %p158, %p159
      %s162 = sadd.s32 %s161, 1
      %p165 = scmp.eq.s32.totalorder %s22, 1
      %p166 = scmp.ne.s32.totalorder %s161, %s163
      %p167 = scmp.eq.s32.totalorder %s22, 0
      %p168 = por %p166, %p167
      %p169 = scmp.ne.s32.totalorder %s161, %s163
      %p170 = scmp.eq.s32.totalorder %s27, 1
      %p171 = por %p169, %p170
      %p172 = scmp.ne.s32.totalorder %s163, %s164
      %p173 = scmp.eq.s32.totalorder %s27, 0
      %p174 = por %p172, %p173
      %p175 = scmp.ne.s32.totalorder %s163, %s164
      %p176 = scmp.eq.s32.totalorder %s28, 1
      %p177 = por %p175, %p176
      %p179 = scmp.ne.s32.totalorder %s164, %s178
      %p180 = scmp.eq.s32.totalorder %s28, 0
      %p181 = por %p179, %p180
      %s183 = sadd.s32 %s182, 1
      %p186 = scmp.eq.s32.totalorder %s22, 1
      %p187 = scmp.ne.s32.totalorder %s182, %s184
      %p188 = scmp.eq.s32.totalorder %s22, 0
      %p189 = por %p187, %p188
      %p190 = scmp.ne.s32.totalorder %s182, %s184
      %p191 = scmp.eq.s32.totalorder %s27, 1
      %p192 = por %p190, %p191
      %p193 = scmp.ne.s32.totalorder %s184, %s185
      %p194 = scmp.eq.s32.totalorder %s27, 0
      %p195 = por %p193, %p194
      %p196 = scmp.ne.s32.totalorder %s184, %s185
      %p197 = scmp.eq.s32.totalorder %s28, 1
      %p198 = por %p196, %p197
      %p200 = scmp.ne.s32.totalorder %s185, %s199
      %p201 = scmp.eq.s32.totalorder %s28, 0
      %p202 = por %p200, %p201
      %s204 = sadd.s32 %s203, 1
      %p207 = scmp.eq.s32.totalorder %s22, 1
      %p208 = scmp.ne.s32.totalorder %s203, %s205
      %p209 = scmp.eq.s32.totalorder %s22, 0
      %p210 = por %p208, %p209
      %p211 = scmp.ne.s32.totalorder %s203, %s205
      %p212 = scmp.eq.s32.totalorder %s27, 1
      %p213 = por %p211, %p212
      %p214 = scmp.ne.s32.totalorder %s205, %s206
      %p215 = scmp.eq.s32.totalorder %s27, 0
      %p216 = por %p214, %p215
      %p217 = scmp.ne.s32.totalorder %s205, %s206
      %p218 = scmp.eq.s32.totalorder %s28, 1
      %p219 = por %p217, %p218
      %p221 = scmp.ne.s32.totalorder %s206, %s220
      %p222 = scmp.eq.s32.totalorder %s28, 0
      %p223 = por %p221, %p222
      %s225 = sadd.s32 %s224, 1
      %p228 = scmp.eq.s32.totalorder %s22, 1
      %p229 = scmp.ne.s32.totalorder %s224, %s226
      %p230 = scmp.eq.s32.totalorder %s22, 0
      %p231 = por %p229, %p230
      %p232 = scmp.ne.s32.totalorder %s224, %s226
      %p233 = scmp.eq.s32.totalorder %s27, 1
      %p234 = por %p232, %p233
      %p235 = scmp.ne.s32.totalorder %s226, %s227
      %p236 = scmp.eq.s32.totalorder %s27, 0
      %p237 = por %p235, %p236
      %p238 = scmp.ne.s32.totalorder %s226, %s227
      %p239 = scmp.eq.s32.totalorder %s28, 1
      %p240 = por %p238, %p239
      %p242 = scmp.ne.s32.totalorder %s227, %s241
      %p243 = scmp.eq.s32.totalorder %s28, 0
      %p244 = por %p242, %p243
      %s246 = sadd.s32 %s245, 1
      %p249 = scmp.eq.s32.totalorder %s22, 1
      %p250 = scmp.ne.s32.totalorder %s245, %s247
      %p251 = scmp.eq.s32.totalorder %s22, 0
      %p252 = por %p250, %p251
      %p253 = scmp.ne.s32.totalorder %s245, %s247
      %p254 = scmp.eq.s32.totalorder %s27, 1
      %p255 = por %p253, %p254
      %p256 = scmp.ne.s32.totalorder %s247, %s248
      %p257 = scmp.eq.s32.totalorder %s27, 0
      %p258 = por %p256, %p257
      %p259 = scmp.ne.s32.totalorder %s247, %s248
      %p260 = scmp.eq.s32.totalorder %s28, 1
      %p261 = por %p259, %p260
      %p263 = scmp.ne.s32.totalorder %s248, %s262
      %p264 = scmp.eq.s32.totalorder %s28, 0
      %p265 = por %p263, %p264
      %s267 = sadd.s32 %s266, 1
      %p270 = scmp.eq.s32.totalorder %s22, 1
      %p271 = scmp.ne.s32.totalorder %s266, %s268
      %p272 = scmp.eq.s32.totalorder %s22, 0
      %p273 = por %p271, %p272
      %p274 = scmp.ne.s32.totalorder %s266, %s268
      %p275 = scmp.eq.s32.totalorder %s27, 1
      %p276 = por %p274, %p275
      %p277 = scmp.ne.s32.totalorder %s268, %s269
      %p278 = scmp.eq.s32.totalorder %s27, 0
      %p279 = por %p277, %p278
      %p280 = scmp.ne.s32.totalorder %s268, %s269
      %p281 = scmp.eq.s32.totalorder %s28, 1
      %p282 = por %p280, %p281
      %p284 = scmp.ne.s32.totalorder %s269, %s283
      %p285 = scmp.eq.s32.totalorder %s28, 0
      %p286 = por %p284, %p285
      %s288 = sadd.s32 %s287, 1
      %p291 = scmp.eq.s32.totalorder %s22, 1
      %p292 = scmp.ne.s32.totalorder %s287, %s289
      %p293 = scmp.eq.s32.totalorder %s22, 0
      %p294 = por %p292, %p293
      %p295 = scmp.ne.s32.totalorder %s287, %s289
      %p296 = scmp.eq.s32.totalorder %s27, 1
      %p297 = por %p295, %p296
      %p298 = scmp.ne.s32.totalorder %s289, %s290
      %p299 = scmp.eq.s32.totalorder %s27, 0
      %p300 = por %p298, %p299
      %p301 = scmp.ne.s32.totalorder %s289, %s290
      %p302 = scmp.eq.s32.totalorder %s28, 1
      %p303 = por %p301, %p302
      %p305 = scmp.ne.s32.totalorder %s290, %s304
      %p306 = scmp.eq.s32.totalorder %s28, 0
      %p307 = por %p305, %p306
      %s308 = ssub.s32 %s22, %s29
      %p309 = scmp.eq.s32.totalorder %s308, 0
      %s311 = sadd.s32 %s310, 1
      %s312 = scalar_select %p309, %s310, %s311
      %p315 = pneg %p309
      %p316 = scmp.eq.s32.totalorder %s22, 1
      %p317 = por %p315, %p316
      %p318 = scmp.ne.s32.totalorder %s310, %s313
      %p319 = scmp.eq.s32.totalorder %s22, 0
      %p320 = por %p318, %p319
      %p321 = scmp.ne.s32.totalorder %s310, %s313
      %p322 = scmp.eq.s32.totalorder %s27, 1
      %p323 = por %p321, %p322
      %p324 = scmp.ne.s32.totalorder %s313, %s314
      %p325 = scmp.eq.s32.totalorder %s27, 0
      %p326 = por %p324, %p325
      %p327 = scmp.ne.s32.totalorder %s313, %s314
      %p328 = scmp.eq.s32.totalorder %s28, 1
      %p329 = por %p327, %p328
      %p331 = scmp.ne.s32.totalorder %s314, %s330
      %p332 = scmp.eq.s32.totalorder %s28, 0
      %p333 = por %p331, %p332
      %p334 = scmp.le.s32.totalorder 1, %s22
      %p335 = scmp.lt.s32.totalorder %s22, 3
      %p336 = pnand %p334, %p335
      %p337 = pneg %p336
      // Predicated region
      $region9: #{tpu_custom_call.1} parent=5 // pred_check
        _
      $region10: #{tpu_custom_call.1} parent=5 // pred_check_branch
        %339 = sbr.rel (%p336) target = $region12
      $region11: #{tpu_custom_call.1} parent=5 // pred_region
        %s340 = ssub.s32 %s22, 1
        // Predicated region
        $region13: #{tpu_custom_call.1} parent=11 // pred_check
          %p341 = pneg %p69
        $region14: #{tpu_custom_call.1} parent=11 // pred_check_branch
          %343 = sbr.rel (%p341) target = $region16
        $region15: #{tpu_custom_call.1} parent=11 // pred_region
          _
        $region16: #{tpu_custom_call.1} parent=11 // pred_fallthru
          _
        // Predicated region
        $region17: #{tpu_custom_call.1} parent=11 // pred_check
          %p344 = pneg %p90
        $region18: #{tpu_custom_call.1} parent=11 // pred_check_branch
          %346 = sbr.rel (%p344) target = $region20
        $region19: #{tpu_custom_call.1} parent=11 // pred_region
          _
        $region20: #{tpu_custom_call.1} parent=11 // pred_fallthru
          _
        // Predicated region
        $region21: #{tpu_custom_call.1} parent=11 // pred_check
          %p347 = pneg %p111
        $region22: #{tpu_custom_call.1} parent=11 // pred_check_branch
          %349 = sbr.rel (%p347) target = $region24
        $region23: #{tpu_custom_call.1} parent=11 // pred_region
          _
        $region24: #{tpu_custom_call.1} parent=11 // pred_fallthru
          _
        // Predicated region
        $region25: #{tpu_custom_call.1} parent=11 // pred_check
          %p350 = pneg %p132
        $region26: #{tpu_custom_call.1} parent=11 // pred_check_branch
          %352 = sbr.rel (%p350) target = $region28
        $region27: #{tpu_custom_call.1} parent=11 // pred_region
          _
        $region28: #{tpu_custom_call.1} parent=11 // pred_fallthru
          _
        // Predicated region
        $region29: #{tpu_custom_call.1} parent=11 // pred_check
          %p353 = pneg %p153
        $region30: #{tpu_custom_call.1} parent=11 // pred_check_branch
          %355 = sbr.rel (%p353) target = $region32
        $region31: #{tpu_custom_call.1} parent=11 // pred_region
          _
        $region32: #{tpu_custom_call.1} parent=11 // pred_fallthru
          _
        // Predicated region
        $region33: #{tpu_custom_call.1} parent=11 // pred_check
          %p356 = pneg %p174
        $region34: #{tpu_custom_call.1} parent=11 // pred_check_branch
          %358 = sbr.rel (%p356) target = $region36
        $region35: #{tpu_custom_call.1} parent=11 // pred_region
          _
        $region36: #{tpu_custom_call.1} parent=11 // pred_fallthru
          _
        // Predicated region
        $region37: #{tpu_custom_call.1} parent=11 // pred_check
          %p359 = pneg %p195
        $region38: #{tpu_custom_call.1} parent=11 // pred_check_branch
          %361 = sbr.rel (%p359) target = $region40
        $region39: #{tpu_custom_call.1} parent=11 // pred_region
          _
        $region40: #{tpu_custom_call.1} parent=11 // pred_fallthru
          _
        // Predicated region
        $region41: #{tpu_custom_call.1} parent=11 // pred_check
          %p362 = pneg %p216
        $region42: #{tpu_custom_call.1} parent=11 // pred_check_branch
          %364 = sbr.rel (%p362) target = $region44
        $region43: #{tpu_custom_call.1} parent=11 // pred_region
          _
        $region44: #{tpu_custom_call.1} parent=11 // pred_fallthru
          _
        // Predicated region
        $region45: #{tpu_custom_call.1} parent=11 // pred_check
          %p365 = pneg %p237
        $region46: #{tpu_custom_call.1} parent=11 // pred_check_branch
          %367 = sbr.rel (%p365) target = $region48
        $region47: #{tpu_custom_call.1} parent=11 // pred_region
          _
        $region48: #{tpu_custom_call.1} parent=11 // pred_fallthru
          _
        // Predicated region
        $region49: #{tpu_custom_call.1} parent=11 // pred_check
          %p368 = pneg %p258
        $region50: #{tpu_custom_call.1} parent=11 // pred_check_branch
          %370 = sbr.rel (%p368) target = $region52
        $region51: #{tpu_custom_call.1} parent=11 // pred_region
          _
        $region52: #{tpu_custom_call.1} parent=11 // pred_fallthru
          _
        // Predicated region
        $region53: #{tpu_custom_call.1} parent=11 // pred_check
          %p371 = pneg %p279
        $region54: #{tpu_custom_call.1} parent=11 // pred_check_branch
          %373 = sbr.rel (%p371) target = $region56
        $region55: #{tpu_custom_call.1} parent=11 // pred_region
          _
        $region56: #{tpu_custom_call.1} parent=11 // pred_fallthru
          _
        // Predicated region
        $region57: #{tpu_custom_call.1} parent=11 // pred_check
          %p374 = pneg %p300
        $region58: #{tpu_custom_call.1} parent=11 // pred_check_branch
          %376 = sbr.rel (%p374) target = $region60
        $region59: #{tpu_custom_call.1} parent=11 // pred_region
          _
        $region60: #{tpu_custom_call.1} parent=11 // pred_fallthru
          _
      $region12: #{tpu_custom_call.1} parent=5 // pred_fallthru
        _
      %p377 = scmp.lt.s32.totalorder %s22, 2
      // Predicated region
      $region61: #{tpu_custom_call.1} parent=5 // pred_check
        %p378 = pneg %p377
      $region62: #{tpu_custom_call.1} parent=5 // pred_check_branch
        %380 = sbr.rel (%p378) target = $region64
      $region63: #{tpu_custom_call.1} parent=5 // pred_region
        // Predicated region
        $region65: #{tpu_custom_call.1} parent=63 // pred_check
          %p381 = pneg %p42
        $region66: #{tpu_custom_call.1} parent=63 // pred_check_branch
          %383 = sbr.rel (%p381) target = $region68
        $region67: #{tpu_custom_call.1} parent=63 // pred_region
          %p384 = scmp.lt.s32.totalorder %s22, 1
          %s385 = scalar_select %p384, %s22, 1
          %s386 = smul.addr %s385, 8
          %s387 = scalar_lea.vmem %s0, %s386
        $region68: #{tpu_custom_call.1} parent=63 // pred_fallthru
          _
      $region64: #{tpu_custom_call.1} parent=5 // pred_fallthru
        _
      %p388 = scmp.le.s32.totalorder 1, %s22
      %p389 = scmp.lt.s32.totalorder %s22, 3
      %p390 = pnand %p388, %p389
      %p391 = pneg %p390
      // Predicated region
      $region69: #{tpu_custom_call.1} parent=5 // pred_check
        _
      $region70: #{tpu_custom_call.1} parent=5 // pred_check_branch
        %393 = sbr.rel (%p390) target = $region72
      $region71: #{tpu_custom_call.1} parent=5 // pred_region
        %s394 = ssub.s32 %s22, 1
        %p395 = scmp.lt.s32.totalorder %s27, 1
        %s396 = scalar_select %p395, %s27, 1
        %s397 = smul.addr %s396, 8
        %s398 = scalar_lea.vmem %s0, %s397
        %p399 = pneg %p48
        %p400 = pneg %p45
        %p401 = pneg %p69
        %p402 = pneg %p66
        %p403 = pneg %p90
        %p404 = pneg %p87
        %p405 = pneg %p111
        %p406 = pneg %p108
        %p407 = pneg %p132
        %p408 = pneg %p129
        %p409 = pneg %p153
        %p410 = pneg %p150
        %p411 = pneg %p174
        %p412 = pneg %p171
        %p413 = pneg %p195
        %p414 = pneg %p192
        %p415 = pneg %p216
        %p416 = pneg %p213
        %p417 = pneg %p237
        %p418 = pneg %p234
        %p419 = pneg %p258
        %p420 = pneg %p255
        %p421 = pneg %p279
        %p422 = pneg %p276
        %p423 = pneg %p300
        %p424 = pneg %p297
        %p425 = pneg %p326
        %p426 = pneg %p323
        %s427 = sand.u32 %s313, 1
        %s428 = scalar_lea.sflag [#allocation3], %s427
        %s429 = sand.u32 %s313, 1
        %s430 = smul.addr %s429, 8
        %s431 = scalar_lea.vmem [#allocation2], %s430
        %p432 = scmp.lt.s32.totalorder %s27, 1
        %s433 = scalar_select %p432, %s27, 1
        %s434 = smul.addr %s433, 8
        %s435 = scalar_lea.vmem %s0, %s434
        %v437 = vld [vmem:[%s435] sm:$0xff]
        %v438 = vld [vmem:[%s1] sm:$0x1]
        %v439 = vld [vmem:[%s2] sm:$0x1]
        %vm440 = vcmask 130048
        %v441 = vsel %vm440, %v437, 0.0
        %442 = vadd.xlane.f32.xlu0 %v441
        %v443 = vpop.xlane.xlu0 %442
        %v444 = vrcp.pop 16.0
        %v445 = vmul.f32 16.0, %v444
        %v446 = vsub.f32 1.0, %v445
        %v447 = vmul.f32 %v444, %v446
        %v448 = vadd.f32 %v444, %v447
        %vm449 = vweird.f32 %v444
        %v450 = vsel %vm449, %v444, %v448
        %v451 = vmul.f32 %v443, %v450
        %v452 = vsub.f32 %v437, %v451
        %v453 = vmul.f32 %v452, %v452
        %v454 = vsel %vm440, %v453, 0.0
        %455 = vadd.xlane.f32.xlu0 %v454
        %v456 = vpop.xlane.xlu0 %455
        %v457 = vmul.f32 %v456, %v450
        %v458 = vadd.f32 %v457, 1e-05
        %v459 = vrsqrt.pop %v458
        %v460 = vmul.f32 %v459, %v458
        %v461 = vmul.f32 %v460, %v459
        %v462 = vmul.f32 0.5, %v461
        %v463 = vsub.f32 1.5, %v462
        %v464 = vmul.f32 %v459, %v463
        %vm465 = vweird.f32 %v458
        %vm466 = vweird.f32 %v459
        %vm467 = vmor %vm465, %vm466
        %v468 = vsel %vm467, %v459, %v464
        %v469 = vmul.f32 %v452, %v468
        %v471 = vperm.slane %v438, 0
        %v473 = vmul.f32 %v469, %v471
        %v475 = vperm.slane %v439, 0
        %v477 = vadd.f32 %v473, %v475
        %v478 = vpack.c.bf16 %v477, %v477
        %v479 = vld [vmem:[%s5] sm:$0xf]
        %v480 = vld [vmem:[%s5 + $0x4] sm:$0xf]
        %v481 = vld [vmem:[%s5 + $0x8] sm:$0xf]
        %v482 = vld [vmem:[%s7] sm:$0xf]
        %v483 = vld [vmem:[%s6] sm:$0xff]
        %v484 = vld [vmem:[%s6 + $0x8] sm:$0xff]
        %v485 = vld [vmem:[%s6 + $0x10] sm:$0xff]
        %v486 = vld [vmem:[%s8] sm:$0xff]
        %488 = vset.pattern.permute.xlu0 0
        %489 = vperm.xlu0 %488, %v483
        %v490 = vpop.permute.xlu0 %489
        %493 = vset.pattern.permute.xlu0 0
        %494 = vperm.xlu0 %493, %v484
        %v495 = vpop.permute.xlu0 %494
        %498 = vset.pattern.permute.xlu0 0
        %499 = vperm.xlu0 %498, %v485
        %v500 = vpop.permute.xlu0 %499
        %v505 = vunpack.c.l.b16 %v479
        %v506 = vunpack.c.l.b16 %v480
        %v507 = vunpack.c.l.b16 %v481
        %v508 = vpack.c.b16 %v506, %v505
        %v509 = vpack.c.b16 %v507, %v507
        %vm510 = vcmask 64512
        %v512 = vsel %vm510, %v508, 0
        %v515 = vsel %vm510, %v509, 0
        %vm517 = vcmask 1043456
        %v519 = vsel %vm517, %v478, 0
        %521 = vmatpush.bf16.msra.mxu0 0
        %522 = vmatpush.bf16.msra.mxu0 0
        %523 = vmatpush.bf16.msra.mxu0 0
        %524 = vmatpush.bf16.msra.mxu0 0
        %525 = vmatpush.bf16.msra.mxu0 0
        %526 = vmatpush.bf16.msra.mxu0 0
        %527 = vmatpush.bf16.msra.mxu0 0
        %528 = vmatpush.bf16.msra.mxu0 %v519
        %529 = vmatmul.bf16.gmra.mxu0 %v512
        %v530 = vpop.f32.mrf.mxu0
        %v531 = vadd.f32 %v490, %v530
        %v532 = vpop.f32.mrf.mxu0
        %v533 = vadd.f32 %v495, %v532
        %534 = vmatmul.bf16.gmra.mxu0 %v515
        %v535 = vpop.f32.mrf.mxu0
        %v536 = vadd.f32 %v500, %v535
        %v537 = vpop.f32.mrf.mxu0
        %538 = vdwg.mxu0
        %v539 = vmul.f32 %v531, 0.5
        %v540 = vmul.f32 %v533, 0.5
        %v541 = vmul.f32 %v536, 0.5
        %v542 = vmul.f32 %v531, 0.70710677
        %v543 = vmul.f32 %v533, 0.70710677
        %v544 = vmul.f32 %v536, 0.70710677
        %v545 = vmul.f32 %v542, %v542
        %v546 = vmin.f32 16.0, %v545
        %v547 = vmul.f32 %v546, 2.1237322e-06
        %v548 = vadd.f32 %v547, 0.00028619796
        %v549 = vmul.f32 %v546, %v548
        %v550 = vadd.f32 %v549, 0.0036580483
        %v551 = vmul.f32 %v546, %v550
        %v552 = vadd.f32 %v551, 0.05243302
        %v553 = vmul.f32 %v546, %v552
        %v554 = vadd.f32 %v553, 0.18741608
        %v555 = vmul.f32 %v546, %v554
        %v556 = vadd.f32 %v555, 1.1283791
        %v557 = vmul.f32 %v542, %v556
        %v558 = vmul.f32 %v546, 3.8918573e-05
        %v559 = vadd.f32 %v558, 0.001143296
        %v560 = vmul.f32 %v546, %v559
        %v561 = vadd.f32 %v560, 0.014752088
        %v562 = vmul.f32 %v546, %v561
        %v563 = vadd.f32 %v562, 0.112945676
        %v564 = vmul.f32 %v546, %v563
        %v565 = vadd.f32 %v564, 0.4994258
        %v566 = vmul.f32 %v546, %v565
        %v567 = vadd.f32 %v566, 1.0
        %v568 = vrcp.pop %v567
        %v569 = vmul.f32 %v567, %v568
        %v570 = vsub.f32 1.0, %v569
        %v571 = vmul.f32 %v568, %v570
        %v572 = vadd.f32 %v568, %v571
        %vm573 = vweird.f32 %v567
        %vm574 = vweird.f32 %v568
        %vm575 = vmor %vm573, %vm574
        %v576 = vsel %vm575, %v568, %v572
        %v577 = vand.u32 2147483647, %v567
        %vm578 = vcmp.eq.f32.partialorder %v577, 8.507059e+37
        %v579 = vand.u32 %v567, 2147483648
        %v580 = vor.u32 1.1754944e-38, %v579
        %v581 = vsel %vm578, %v580, %v576
        %v582 = vmul.f32 %v557, %v581
        %v583 = vmin.f32 %v582, 1.0
        %v584 = vmax.f32 %v583, -1.0
        %v585 = vmul.f32 %v543, %v543
        %v586 = vmin.f32 16.0, %v585
        %v587 = vmul.f32 %v586, 2.1237322e-06
        %v588 = vadd.f32 %v587, 0.00028619796
        %v589 = vmul.f32 %v586, %v588
        %v590 = vadd.f32 %v589, 0.0036580483
        %v591 = vmul.f32 %v586, %v590
        %v592 = vadd.f32 %v591, 0.05243302
        %v593 = vmul.f32 %v586, %v592
        %v594 = vadd.f32 %v593, 0.18741608
        %v595 = vmul.f32 %v586, %v594
        %v596 = vadd.f32 %v595, 1.1283791
        %v597 = vmul.f32 %v543, %v596
        %v598 = vmul.f32 %v586, 3.8918573e-05
        %v599 = vadd.f32 %v598, 0.001143296
        %v600 = vmul.f32 %v586, %v599
        %v601 = vadd.f32 %v600, 0.014752088
        %v602 = vmul.f32 %v586, %v601
        %v603 = vadd.f32 %v602, 0.112945676
        %v604 = vmul.f32 %v586, %v603
        %v605 = vadd.f32 %v604, 0.4994258
        %v606 = vmul.f32 %v586, %v605
        %v607 = vadd.f32 %v606, 1.0
        %v608 = vrcp.pop %v607
        %v609 = vmul.f32 %v607, %v608
        %v610 = vsub.f32 1.0, %v609
        %v611 = vmul.f32 %v608, %v610
        %v612 = vadd.f32 %v608, %v611
        %vm613 = vweird.f32 %v607
        %vm614 = vweird.f32 %v608
        %vm615 = vmor %vm613, %vm614
        %v616 = vsel %vm615, %v608, %v612
        %v617 = vand.u32 2147483647, %v607
        %vm618 = vcmp.eq.f32.partialorder %v617, 8.507059e+37
        %v619 = vand.u32 %v607, 2147483648
        %v620 = vor.u32 1.1754944e-38, %v619
        %v621 = vsel %vm618, %v620, %v616
        %v622 = vmul.f32 %v597, %v621
        %v623 = vmin.f32 %v622, 1.0
        %v624 = vmax.f32 %v623, -1.0
        %v625 = vmul.f32 %v544, %v544
        %v626 = vmin.f32 16.0, %v625
        %v627 = vmul.f32 %v626, 2.1237322e-06
        %v628 = vadd.f32 %v627, 0.00028619796
        %v629 = vmul.f32 %v626, %v628
        %v630 = vadd.f32 %v629, 0.0036580483
        %v631 = vmul.f32 %v626, %v630
        %v632 = vadd.f32 %v631, 0.05243302
        %v633 = vmul.f32 %v626, %v632
        %v634 = vadd.f32 %v633, 0.18741608
        %v635 = vmul.f32 %v626, %v634
        %v636 = vadd.f32 %v635, 1.1283791
        %v637 = vmul.f32 %v544, %v636
        %v638 = vmul.f32 %v626, 3.8918573e-05
        %v639 = vadd.f32 %v638, 0.001143296
        %v640 = vmul.f32 %v626, %v639
        %v641 = vadd.f32 %v640, 0.014752088
        %v642 = vmul.f32 %v626, %v641
        %v643 = vadd.f32 %v642, 0.112945676
        %v644 = vmul.f32 %v626, %v643
        %v645 = vadd.f32 %v644, 0.4994258
        %v646 = vmul.f32 %v626, %v645
        %v647 = vadd.f32 %v646, 1.0
        %v648 = vrcp.pop %v647
        %v649 = vmul.f32 %v647, %v648
        %v650 = vsub.f32 1.0, %v649
        %v651 = vmul.f32 %v648, %v650
        %v652 = vadd.f32 %v648, %v651
        %vm653 = vweird.f32 %v647
        %vm654 = vweird.f32 %v648
        %vm655 = vmor %vm653, %vm654
        %v656 = vsel %vm655, %v648, %v652
        %v657 = vand.u32 2147483647, %v647
        %vm658 = vcmp.eq.f32.partialorder %v657, 8.507059e+37
        %v659 = vand.u32 %v647, 2147483648
        %v660 = vor.u32 1.1754944e-38, %v659
        %v661 = vsel %vm658, %v660, %v656
        %v662 = vmul.f32 %v637, %v661
        %v663 = vmin.f32 %v662, 1.0
        %v664 = vmax.f32 %v663, -1.0
        %v665 = vadd.f32 %v584, 1.0
        %v666 = vadd.f32 %v624, 1.0
        %v667 = vadd.f32 %v664, 1.0
        %v668 = vmul.f32 %v539, %v665
        %v669 = vmul.f32 %v540, %v666
        %v670 = vmul.f32 %v541, %v667
        %v671 = vpack.c.bf16 %v669, %v668
        %v672 = vpack.c.bf16 %v670, %v670
        %674 = vset.pattern.permute.xlu0 0
        %675 = vperm.xlu0 %674, %v486
        %v676 = vpop.permute.xlu0 %675
        %vm678 = vcmask 195584
        %v680 = vsel %vm678, %v482, 0
        %v683 = vsel %vm517, %v672, 0
        %685 = vmatpush.bf16.msra.mxu0 0
        %686 = vmatpush.bf16.msra.mxu0 0
        %687 = vmatpush.bf16.msra.mxu0 0
        %688 = vmatpush.bf16.msra.mxu0 0
        %689 = vmatpush.bf16.msra.mxu0 0
        %690 = vmatpush.bf16.msra.mxu0 0
        %691 = vmatpush.bf16.msra.mxu0 %v683
        %692 = vmatpush.bf16.msra.mxu0 %v671
        %693 = vmatmul.bf16.gmra.mxu0 %v680
        %v694 = vpop.f32.mrf.mxu0
        %v695 = vadd.f32 %v676, %v694
        %v696 = vpop.f32.mrf.mxu0
        %697 = vdwg.mxu0
        %v698 = vadd.f32 %v437, %v695
        %v699 = vld [vmem:[%s3] sm:$0x1]
        %v700 = vld [vmem:[%s4] sm:$0x1]
        %v701 = vsel %vm440, %v698, 0.0
        %702 = vadd.xlane.f32.xlu0 %v701
        %v703 = vpop.xlane.xlu0 %702
        %v704 = vmul.f32 %v703, %v450
        %v705 = vsub.f32 %v698, %v704
        %v706 = vmul.f32 %v705, %v705
        %v707 = vsel %vm440, %v706, 0.0
        %708 = vadd.xlane.f32.xlu0 %v707
        %v709 = vpop.xlane.xlu0 %708
        %v710 = vmul.f32 %v709, %v450
        %v711 = vadd.f32 %v710, 1e-05
        %v712 = vrsqrt.pop %v711
        %v713 = vmul.f32 %v712, %v711
        %v714 = vmul.f32 %v713, %v712
        %v715 = vmul.f32 0.5, %v714
        %v716 = vsub.f32 1.5, %v715
        %v717 = vmul.f32 %v712, %v716
        %vm718 = vweird.f32 %v711
        %vm719 = vweird.f32 %v712
        %vm720 = vmor %vm718, %vm719
        %v721 = vsel %vm720, %v712, %v717
        %v722 = vmul.f32 %v705, %v721
        %v724 = vperm.slane %v699, 0
        %v726 = vmul.f32 %v722, %v724
        %v728 = vperm.slane %v700, 0
        %v730 = vadd.f32 %v726, %v728
        %v731 = vpack.c.bf16 %v730, %v730
        %v732 = vld [vmem:[%s9] sm:$0xf]
        %v733 = vld [vmem:[%s9 + $0x4] sm:$0xf]
        %v734 = vld [vmem:[%s10] sm:$0x1]
        %v736 = vperm.slane %v734, 0
        %v740 = vunpack.c.l.b16 %v732
        %v741 = vunpack.c.l.b16 %v733
        %v742 = vpack.c.b16 %v741, %v740
        %v745 = vsel %vm440, %v731, 0
        %747 = vmatpush.bf16.msra.mxu0 0
        %748 = vmatpush.bf16.msra.mxu0 0
        %749 = vmatpush.bf16.msra.mxu0 0
        %750 = vmatpush.bf16.msra.mxu0 0
        %751 = vmatpush.bf16.msra.mxu0 0
        %752 = vmatpush.bf16.msra.mxu0 0
        %753 = vmatpush.bf16.msra.mxu0 0
        %754 = vmatpush.bf16.msra.mxu0 %v742
        %755 = vmatmul.bf16.gmra.mxu0 %v745
        %v756 = vpop.f32.mrf.mxu0
        %v757 = vadd.f32 %v736, %v756
        %v758 = vpop.f32.mrf.mxu0
        %759 = vdwg.mxu0
        %v760 = vmul.f32 %v757, 0.5
        %v761 = vmul.f32 %v757, 0.70710677
        %v762 = vmul.f32 %v761, %v761
        %v763 = vmin.f32 16.0, %v762
        %v764 = vmul.f32 %v763, 2.1237322e-06
        %v765 = vadd.f32 %v764, 0.00028619796
        %v766 = vmul.f32 %v763, %v765
        %v767 = vadd.f32 %v766, 0.0036580483
        %v768 = vmul.f32 %v763, %v767
        %v769 = vadd.f32 %v768, 0.05243302
        %v770 = vmul.f32 %v763, %v769
        %v771 = vadd.f32 %v770, 0.18741608
        %v772 = vmul.f32 %v763, %v771
        %v773 = vadd.f32 %v772, 1.1283791
        %v774 = vmul.f32 %v761, %v773
        %v775 = vmul.f32 %v763, 3.8918573e-05
        %v776 = vadd.f32 %v775, 0.001143296
        %v777 = vmul.f32 %v763, %v776
        %v778 = vadd.f32 %v777, 0.014752088
        %v779 = vmul.f32 %v763, %v778
        %v780 = vadd.f32 %v779, 0.112945676
        %v781 = vmul.f32 %v763, %v780
        %v782 = vadd.f32 %v781, 0.4994258
        %v783 = vmul.f32 %v763, %v782
        %v784 = vadd.f32 %v783, 1.0
        %v785 = vrcp.pop %v784
        %v786 = vmul.f32 %v784, %v785
        %v787 = vsub.f32 1.0, %v786
        %v788 = vmul.f32 %v785, %v787
        %v789 = vadd.f32 %v785, %v788
        %vm790 = vweird.f32 %v784
        %vm791 = vweird.f32 %v785
        %vm792 = vmor %vm790, %vm791
        %v793 = vsel %vm792, %v785, %v789
        %v794 = vand.u32 2147483647, %v784
        %vm795 = vcmp.eq.f32.partialorder %v794, 8.507059e+37
        %v796 = vand.u32 %v784, 2147483648
        %v797 = vor.u32 1.1754944e-38, %v796
        %v798 = vsel %vm795, %v797, %v793
        %v799 = vmul.f32 %v774, %v798
        %v800 = vmin.f32 %v799, 1.0
        %v801 = vmax.f32 %v800, -1.0
        %v802 = vadd.f32 %v801, 1.0
        %v803 = vmul.f32 %v760, %v802
        %v804 = vpack.c.bf16 %v803, %v803
        %v805 = vld [vmem:[%s11] sm:$0xf]
        %v806 = vld [vmem:[%s11 + $0x4] sm:$0xf]
        %v807 = vld [vmem:[%s11 + $0x8] sm:$0xf]
        %v808 = vld [vmem:[%s11 + $0xc] sm:$0xf]
        %v809 = vld [vmem:[%s12] sm:$0x1]
        %v811 = vperm.slane %v809, 0
        %v817 = vunpack.c.l.b16 %v805
        %v818 = vunpack.c.l.b16 %v806
        %v819 = vunpack.c.l.b16 %v807
        %v820 = vunpack.c.l.b16 %v808
        %v821 = vpack.c.b16 %v818, %v817
        %v822 = vpack.c.b16 %v820, %v819
        %vm825 = vcmask 261120
        %v827 = vsel %vm825, %v804, 0
        %829 = vmatpush.bf16.msra.mxu0 0
        %830 = vmatpush.bf16.msra.mxu0 0
        %831 = vmatpush.bf16.msra.mxu0 0
        %832 = vmatpush.bf16.msra.mxu0 0
        %833 = vmatpush.bf16.msra.mxu0 0
        %834 = vmatpush.bf16.msra.mxu0 0
        %835 = vmatpush.bf16.msra.mxu0 %v822
        %836 = vmatpush.bf16.msra.mxu0 %v821
        %837 = vmatmul.bf16.gmra.mxu0 %v827
        %v838 = vpop.f32.mrf.mxu0
        %v839 = vadd.f32 %v811, %v838
        %v840 = vpop.f32.mrf.mxu0
        %841 = vdwg.mxu0
        %v842 = vadd.f32 %v698, %v839
        %843 = vst.msk [vmem:[%s431] sm:$0xff] %vm440, %v842
        %s844 = sand.u32 %s313, 1
        %s845 = scalar_lea.sflag [#allocation3], %s844
        %s846 = sand.u32 %s313, 1
        %s847 = smul.addr %s846, 8
        %s848 = scalar_lea.vmem [#allocation2], %s847
        // Predicated region
        $region73: #{tpu_custom_call.1} parent=71 // pred_check
          %p849 = pneg %p323
        $region74: #{tpu_custom_call.1} parent=71 // pred_check_branch
          %851 = sbr.rel (%p849) target = $region76
        $region75: #{tpu_custom_call.1} parent=71 // pred_region
          %853 = vsyncadd %s845, 0
          %s854 = smul.addr %s27, 8
          %s855 = scalar_lea.hbm %s13, %s854
          %s857 = sshll.u32 %s848, 4
          %s858 = int_to_ptr.vmem [resolvable:$true] %s857
          %s859 = sshll.u32 %s855, 4
          %s860 = int_to_ptr.hbm [resolvable:$true] %s859
          %862 = dma.vmem_to_hbm [thread:$0]  %s858, 128, %s860, %s845
        $region76: #{tpu_custom_call.1} parent=71 // pred_fallthru
          _
      $region72: #{tpu_custom_call.1} parent=5 // pred_fallthru
        _
      %p863 = scmp.le.s32.totalorder 2, %s22
      // Predicated region
      $region77: #{tpu_custom_call.1} parent=5 // pred_check
        %p864 = pneg %p863
      $region78: #{tpu_custom_call.1} parent=5 // pred_check_branch
        %866 = sbr.rel (%p864) target = $region80
      $region79: #{tpu_custom_call.1} parent=5 // pred_region
        %s867 = ssub.s32 %s22, 2
        // Predicated region
        $region81: #{tpu_custom_call.1} parent=79 // pred_check
          %p868 = pneg %p329
        $region82: #{tpu_custom_call.1} parent=79 // pred_check_branch
          %870 = sbr.rel (%p868) target = $region84
        $region83: #{tpu_custom_call.1} parent=79 // pred_region
          %s871 = sand.u32 %s314, 1
          %s872 = scalar_lea.sflag [#allocation3], %s871
          %s873 = sand.u32 %s314, 1
          %s874 = smul.addr %s873, 8
          %s875 = scalar_lea.vmem [#allocation2], %s874
          %877 = dma.done %s872, 128
        $region84: #{tpu_custom_call.1} parent=79 // pred_fallthru
          _
      $region80: #{tpu_custom_call.1} parent=5 // pred_fallthru
        _
    $region6: #{tpu_custom_call.1} parent=1 // loop_footer
      %s26 = sadd.s32 1, %s22
    $region7: #{tpu_custom_call.1} parent=1 // loop_footer_branch
      %21 = sbr.rel target = $region3
    $region8: #{tpu_custom_call.1} parent=1 // loop_exit
      _
    %878 = vsyncpa [#allocation3], 1
    %s879 = scalar_lea.sflag [#allocation3], 1
    %880 = vsyncpa %s879, 1

</llo_original>
